<compile_context>
chip_gen: v5e
topology: v5e:2x2
jax: 0.10.0
libtpu: 0.0.40
codegen_flags: <defaults>
</compile_context>

<pallas_src>
import math

import numpy as np
import jax
import jax.numpy as jnp
from jax.experimental import pallas as pl
from jax.experimental.pallas import tpu as pltpu

WSIZE = 11          # SSIM gaussian window size
SIGMA = 1.5         # SSIM gaussian sigma
GPAD = WSIZE // 2   # 5 (SSIM conv padding); Sobel padding is 1
C1 = 0.01 ** 2
C2 = 0.03 ** 2


# ----------------------------------------------------------------------------
# Static banded filter matrices (numpy, trace time).
# ----------------------------------------------------------------------------
def _gaussian_taps():
    g = np.array([math.exp(-((x - WSIZE // 2) ** 2) / (2.0 * SIGMA ** 2))
                  for x in range(WSIZE)], dtype=np.float64)
    return (g / g.sum()).astype(np.float32)


def _conv_band_left(n, taps, pad):
    """M such that (M @ x) applies zero-padded 1-D correlation with `taps` along rows."""
    m = np.zeros((n, n), dtype=np.float32)
    for i in range(n):
        for k, t in enumerate(taps):
            j = i + k - pad
            if 0 <= j < n:
                m[i, j] = t
    return m


def _conv_band_right(n, taps, pad):
    """M such that (x @ M) applies zero-padded 1-D correlation with `taps` along columns."""
    return np.ascontiguousarray(_conv_band_left(n, taps, pad).T)


# ----------------------------------------------------------------------------
# Pallas kernel: one block of P planes in native (P, H, W) layout.
# ----------------------------------------------------------------------------
def _total_loss_kernel(a_ref, b_ref, fh_ref, gw_ref, dw_ref, sw_ref, out_ref):
    P, H, W = a_ref.shape
    PH = P * H

    fh = fh_ref[...]                 # (3H, H)  [gaussian ; sobel-smooth ; sobel-diff]
    gh = fh[:H, :]                   # gaussian rows only
    gw = gw_ref[...]                 # (W, W)  gaussian, W pass
    dw = dw_ref[...]                 # (W, W)  sobel diff [-1,0,1], W pass
    sw = sw_ref[...]                 # (W, W)  sobel smooth [1,2,1], W pass
    mdt = fh.dtype                   # MXU operand dtype (bf16)

    def mm(x, y):
        return jnp.dot(x, y, preferred_element_type=jnp.float32)

    def tsum(x):                     # sublane-axis first (VPU), then one lane reduce
        return jnp.sum(jnp.sum(x, axis=0, keepdims=True))

    l_mu1, l_mu2, l_s11, l_s22, l_s12 = [], [], [], [], []
    l_gxa, l_gxb, l_gya, l_gyb = [], [], [], []
    int_sum = jnp.float32(0.0)

    for p in range(P):               # static unroll, P is small (capped at 8)
        a = a_ref[p]                 # (H, W) f32
        b = b_ref[p]
        int_sum = int_sum + tsum(jnp.abs(a - b))

        # H pass: all three row filters applied to a / b in one matmul each.
        ha = mm(fh, a.astype(mdt))   # (3H, W): [gh@a ; sh@a ; dh@a]
        hb = mm(fh, b.astype(mdt))
        l_mu1.append(ha[:H]);       l_mu2.append(hb[:H])
        l_gxa.append(ha[H:2 * H]);  l_gxb.append(hb[H:2 * H])
        l_gya.append(ha[2 * H:]);   l_gyb.append(hb[2 * H:])
        # Products are formed in f32 (cancellation-safe) and rounded for the MXU.
        l_s11.append(mm(gh, (a * a).astype(mdt)))
        l_s22.append(mm(gh, (b * b).astype(mdt)))
        l_s12.append(mm(gh, (a * b).astype(mdt)))

    # W pass: one batched matmul per W filter; all planes / quantities stacked on
    # sublanes (no block-diagonal weights, no per-plane FLOP waste).
    gw_in = jnp.concatenate(l_mu1 + l_mu2 + l_s11 + l_s22 + l_s12, axis=0)  # (5PH, W)
    dw_in = jnp.concatenate(l_gxa + l_gxb, axis=0)                          # (2PH, W)
    sw_in = jnp.concatenate(l_gya + l_gyb, axis=0)                          # (2PH, W)

    g_out = mm(gw_in.astype(mdt), gw)        # mu1|mu2|s11|s22|s12  (5PH, W) f32
    x_out = mm(dw_in.astype(mdt), dw)        # gx_a | gx_b          (2PH, W)
    y_out = mm(sw_in.astype(mdt), sw)        # gy_a | gy_b          (2PH, W)

    mu1 = g_out[0 * PH:1 * PH]
    mu2 = g_out[1 * PH:2 * PH]
    s11 = g_out[2 * PH:3 * PH]
    s22 = g_out[3 * PH:4 * PH]
    s12 = g_out[4 * PH:5 * PH]

    mu1_sq = mu1 * mu1
    mu2_sq = mu2 * mu2
    mu1_mu2 = mu1 * mu2
    sigma1_sq = s11 - mu1_sq
    sigma2_sq = s22 - mu2_sq
    sigma12 = s12 - mu1_mu2
    num = (2.0 * mu1_mu2 + C1) * (2.0 * sigma12 + C2)
    den = (mu1_sq + mu2_sq + C1) * (sigma1_sq + sigma2_sq + C2)
    ssim_map = num * pl.reciprocal(den, approx=True)      # divide on the EUP

    grad_a = jnp.abs(x_out[:PH]) + jnp.abs(y_out[:PH])
    grad_b = jnp.abs(x_out[PH:]) + jnp.abs(y_out[PH:])

    ssim_sum = tsum(ssim_map)
    grad_sum = tsum(jnp.abs(grad_a - grad_b))

    # Lane-dense partial tile; only sublane 0 holds data (lane0=ssim, 1=grad, 2=int).
    lane = jax.lax.broadcasted_iota(jnp.int32, (1, 8, 128), 2)
    sub = jax.lax.broadcasted_iota(jnp.int32, (1, 8, 128), 1)
    row0 = sub == 0
    out_ref[...] = (jnp.where(row0 & (lane == 0), ssim_sum, 0.0)
                    + jnp.where(row0 & (lane == 1), grad_sum, 0.0)
                    + jnp.where(row0 & (lane == 2), int_sum, 0.0))


# ----------------------------------------------------------------------------
# Wrapper
# ----------------------------------------------------------------------------
def _vmem_capacity_bytes():
    try:
        return int(pltpu.get_tpu_info().vmem_capacity_bytes)
    except Exception:
        return 64 * 1024 * 1024           # conservative: v7x per-TensorCore VMEM


def _planes_per_block(nc, h, w):
    """Planes packed per grid step, derived from this generation's VMEM."""
    budget = int(0.40 * _vmem_capacity_bytes())
    # Rough per-plane footprint: double-buffered f32 inputs (2 arrays x 2 buffers)
    # + ~30 live (H, W) f32 intermediates (H-pass slabs, W-pass stacks, ssim maps).
    per_plane = (2 * 2 + 30) * h * w * 4
    p_cap = max(1, budget // per_plane)
    p_cap = min(p_cap, 8)                  # bound the static per-plane unroll
    if nc >= 2:
        p_cap = min(p_cap, nc // 2)        # keep >= 2 grid steps (v7x has 2 TCs)
    p_cap = max(1, min(p_cap, nc))
    for p in range(p_cap, 0, -1):
        if nc % p == 0:
            return p
    return 1


def _resident_spec(shape):
    """Grid-invariant operand: constant index_map, single-buffered when supported."""
    index_map = lambda i: (0,) * len(shape)
    try:
        return pl.BlockSpec(shape, index_map, pipeline_mode=pl.Buffered(1))
    except Exception:
        return pl.BlockSpec(shape, index_map)


def total_loss(image_a, image_b, *, mxu_dtype=jnp.bfloat16):
    """TotalLoss.forward: (1 - ssim(a,b)) + L1(|sobel(a)|,|sobel(b)|) + L1(a,b)."""
    N, C, H, W = image_a.shape
    NC = N * C
    P = _planes_per_block(NC, H, W)
    G = NC // P

    # Native plane layout: free reshape, no transpose, no extra HBM pass.
    a = image_a.astype(jnp.float32).reshape(NC, H, W)
    b = image_b.astype(jnp.float32).reshape(NC, H, W)

    g = _gaussian_taps()
    smooth = np.array([1.0, 2.0, 1.0], dtype=np.float32)    # Sobel smoothing taps
    diffx = np.array([-1.0, 0.0, 1.0], dtype=np.float32)    # Sobel-x column taps
    diffy = np.array([1.0, 0.0, -1.0], dtype=np.float32)    # Sobel-y row taps

    fh = np.concatenate([_conv_band_left(H, g, GPAD),        # gaussian, H pass
                         _conv_band_left(H, smooth, 1),      # sobel-x row smooth
                         _conv_band_left(H, diffy, 1)],      # sobel-y row diff
                        axis=0)                              # (3H, H)
    fh = jnp.asarray(fh, dtype=mxu_dtype)
    gw = jnp.asarray(_conv_band_right(W, g, GPAD), dtype=mxu_dtype)
    dw = jnp.asarray(_conv_band_right(W, diffx, 1), dtype=mxu_dtype)
    sw = jnp.asarray(_conv_band_right(W, smooth, 1), dtype=mxu_dtype)

    # Advisory cost: 5 H-pass matmuls per plane + 3 batched W-pass matmuls per block.
    weight_itemsize = 2 if mxu_dtype == jnp.bfloat16 else 4
    flops_per_block = 18 * P * H * W * (H + W) + 60 * P * H * W
    cost = pl.CostEstimate(
        flops=int(G * flops_per_block),
        transcendentals=int(NC * H * W),
        bytes_accessed=int(2 * NC * H * W * 4
                           + (3 * H * H + 3 * W * W) * weight_itemsize
                           + G * 8 * 128 * 4))

    vmem_limit = min(int(0.9 * _vmem_capacity_bytes()), 128 * 1024 * 1024)

    partials = pl.pallas_call(
        _total_loss_kernel,
        out_shape=jax.ShapeDtypeStruct((G, 8, 128), jnp.float32),
        grid_spec=pltpu.PrefetchScalarGridSpec(
            num_scalar_prefetch=0,
            grid=(G,),
            in_specs=[
                pl.BlockSpec((P, H, W), lambda i: (i, 0, 0)),   # a planes
                pl.BlockSpec((P, H, W), lambda i: (i, 0, 0)),   # b planes
                _resident_spec((3 * H, H)),                     # fh = [gh; sh; dh]
                _resident_spec((W, W)),                         # gw
                _resident_spec((W, W)),                         # dw
                _resident_spec((W, W)),                         # sw
            ],
            out_specs=pl.BlockSpec((1, 8, 128), lambda i: (i, 0, 0)),
        ),
        compiler_params=pltpu.CompilerParams(
            dimension_semantics=("parallel",),   # no cross-step carry -> 2-TC shardable
            vmem_limit_bytes=vmem_limit,
        ),
        cost_estimate=cost,
    )(a, b, fh, gw, dw, sw)

    sums = jnp.sum(partials, axis=(0, 1))        # (128,); only sublane 0 is non-zero
    total = jnp.float32(NC * H * W)
    ssim_mean = sums[0] / total                  # ssim(a, b), size_average=True
    grad_mean = sums[1] / total                  # F.l1_loss of |sobel| gradient maps
    int_mean = sums[2] / total                   # F.l1_loss of intensities
    return (1.0 - ssim_mean) + grad_mean + int_mean


# ----------------------------------------------------------------------------
# Pure-JAX reference (same PyTorch forward semantics) for a sanity check.
# ----------------------------------------------------------------------------
def _ref_total_loss(image_a, image_b):
    N, C, H, W = image_a.shape
    a = image_a.astype(jnp.float32).reshape(N * C, 1, H, W)
    b = image_b.astype(jnp.float32).reshape(N * C, 1, H, W)

    def conv(x, k, pad):
        return jax.lax.conv_general_dilated(
            x, k, window_strides=(1, 1), padding=[(pad, pad), (pad, pad)],
            dimension_numbers=("NCHW", "OIHW", "NCHW"))

    g = _gaussian_taps()
    win = jnp.asarray(np.outer(g, g).astype(np.float32))[None, None]
    kx = jnp.asarray(np.array([[-1, 0, 1], [-2, 0, 2], [-1, 0, 1]], np.float32))[None, None]
    ky = jnp.asarray(np.array([[1, 2, 1], [0, 0, 0], [-1, -2, -1]], np.float32))[None, None]

    mu1 = conv(a, win, GPAD)
    mu2 = conv(b, win, GPAD)
    s11 = conv(a * a, win, GPAD)
    s22 = conv(b * b, win, GPAD)
    s12 = conv(a * b, win, GPAD)
    mu1_sq, mu2_sq, mu1_mu2 = mu1 * mu1, mu2 * mu2, mu1 * mu2
    sig1, sig2, sig12 = s11 - mu1_sq, s22 - mu2_sq, s12 - mu1_mu2
    ssim_map = ((2 * mu1_mu2 + C1) * (2 * sig12 + C2)) / (
        (mu1_sq + mu2_sq + C1) * (sig1 + sig2 + C2))

    grad_a = jnp.abs(conv(a, kx, 1)) + jnp.abs(conv(a, ky, 1))
    grad_b = jnp.abs(conv(b, kx, 1)) + jnp.abs(conv(b, ky, 1))

    return ((1.0 - jnp.mean(ssim_map))
            + jnp.mean(jnp.abs(grad_a - grad_b))
            + jnp.mean(jnp.abs(a - b)))


if __name__ == "__main__":
    key = jax.random.PRNGKey(0)
    ka, kb = jax.random.split(key)
    # N=2, C=1 (single-channel, as the Sobelxy (1,1,3,3) weight requires), H=W=16
    image_a = jax.random.uniform(ka, (2, 1, 16, 16), dtype=jnp.float32)
    image_b = jax.random.uniform(kb, (2, 1, 16, 16), dtype=jnp.float32)

    loss = jax.jit(total_loss)(image_a, image_b)
    loss = jax.block_until_ready(loss)
    assert jnp.isfinite(loss), "loss is not finite"

    ref = jax.block_until_ready(_ref_total_loss(image_a, image_b))
    assert abs(float(loss) - float(ref)) <= 5e-2 * max(1.0, abs(float(ref))), (
        f"kernel {float(loss)} vs reference {float(ref)}")

    print("KERNEL_OK")
</pallas_src>

<mosaic_0001>
module attributes {stable_mosaic.version = 11 : i64} {
  func.func @_total_loss_kernel(%arg0: i32, %arg1: memref<1x16x16xf32, #tpu.memory_space<vmem>>, %arg2: memref<1x16x16xf32, #tpu.memory_space<vmem>>, %arg3: memref<48x16xbf16, #tpu.memory_space<vmem>>, %arg4: memref<16x16xbf16, #tpu.memory_space<vmem>>, %arg5: memref<16x16xbf16, #tpu.memory_space<vmem>>, %arg6: memref<16x16xbf16, #tpu.memory_space<vmem>>, %arg7: memref<1x8x128xf32, #tpu.memory_space<vmem>>) attributes {dimension_semantics = [#tpu.dimension_semantics<parallel>], iteration_bounds = array<i64: 2>, scalar_prefetch = 0 : i64, scratch_operands = 0 : i64, tpu.core_type = #tpu.core_type<tc>, window_params = [{transform_indices = @transform_0, window_bounds = array<i64: 1, 16, 16>}, {transform_indices = @transform_1, window_bounds = array<i64: 1, 16, 16>}, {pipeline_mode = #tpu.pipeline_mode<synchronous>, transform_indices = @transform_2, window_bounds = array<i64: 48, 16>}, {pipeline_mode = #tpu.pipeline_mode<synchronous>, transform_indices = @transform_3, window_bounds = array<i64: 16, 16>}, {pipeline_mode = #tpu.pipeline_mode<synchronous>, transform_indices = @transform_4, window_bounds = array<i64: 16, 16>}, {pipeline_mode = #tpu.pipeline_mode<synchronous>, transform_indices = @transform_5, window_bounds = array<i64: 16, 16>}, {transform_indices = @transform_6, window_bounds = array<i64: 1, 8, 128>}]} {
    %c0 = arith.constant 0 : index
    %c0_0 = arith.constant 0 : index
    %0 = vector.load %arg3[%c0, %c0_0] : memref<48x16xbf16, #tpu.memory_space<vmem>>, vector<48x16xbf16>
    %1 = vector.extract_strided_slice %0 {offsets = [0, 0], sizes = [16, 16], strides = [1, 1]} : vector<48x16xbf16> to vector<16x16xbf16>
    %c0_1 = arith.constant 0 : index
    %c0_2 = arith.constant 0 : index
    %2 = vector.load %arg4[%c0_1, %c0_2] : memref<16x16xbf16, #tpu.memory_space<vmem>>, vector<16x16xbf16>
    %c0_3 = arith.constant 0 : index
    %c0_4 = arith.constant 0 : index
    %3 = vector.load %arg5[%c0_3, %c0_4] : memref<16x16xbf16, #tpu.memory_space<vmem>>, vector<16x16xbf16>
    %c0_5 = arith.constant 0 : index
    %c0_6 = arith.constant 0 : index
    %4 = vector.load %arg6[%c0_5, %c0_6] : memref<16x16xbf16, #tpu.memory_space<vmem>>, vector<16x16xbf16>
    %c0_7 = arith.constant 0 : index
    %c0_8 = arith.constant 0 : index
    %c0_9 = arith.constant 0 : index
    %5 = vector.load %arg1[%c0_7, %c0_8, %c0_9] : memref<1x16x16xf32, #tpu.memory_space<vmem>>, vector<1x16x16xf32>
    %6 = vector.shape_cast %5 : vector<1x16x16xf32> to vector<16x16xf32>
    %c0_10 = arith.constant 0 : index
    %c0_11 = arith.constant 0 : index
    %c0_12 = arith.constant 0 : index
    %7 = vector.load %arg2[%c0_10, %c0_11, %c0_12] : memref<1x16x16xf32, #tpu.memory_space<vmem>>, vector<1x16x16xf32>
    %8 = vector.shape_cast %7 : vector<1x16x16xf32> to vector<16x16xf32>
    %9 = arith.subf %6, %8 : vector<16x16xf32>
    %10 = math.absf %9 : vector<16x16xf32>
    %cst = arith.constant dense<0.000000e+00> : vector<16xf32>
    %11 = vector.multi_reduction <add>, %10, %cst [0] : vector<16x16xf32> to vector<16xf32>
    %12 = vector.shape_cast %11 : vector<16xf32> to vector<1x16xf32>
    %13 = vector.shape_cast %12 : vector<1x16xf32> to vector<1x1x16xf32>
    %cst_13 = arith.constant dense<0.000000e+00> : vector<1xf32>
    %14 = vector.multi_reduction <add>, %13, %cst_13 [1, 2] : vector<1x1x16xf32> to vector<1xf32>
    %15 = vector.shape_cast %14 : vector<1xf32> to vector<1x1x1xf32>
    %16 = vector.extract %15[0, 0, 0] : f32 from vector<1x1x1xf32>
    %cst_14 = arith.constant 0.000000e+00 : f32
    %17 = arith.addf %cst_14, %16 : f32
    %18 = arith.truncf %6 : vector<16x16xf32> to vector<16x16xbf16>
    %cst_15 = arith.constant dense<0.000000e+00> : vector<48x16xf32>
    %19 = tpu.matmul %0, %18, %cst_15 {dimension_numbers = #tpu.dot_dimension_numbers<[1], [0], [0], [1], [0, 0, 1, 1], [], []>} : vector<48x16xbf16>, vector<16x16xbf16>, vector<48x16xf32> -> vector<48x16xf32>
    %20 = arith.truncf %8 : vector<16x16xf32> to vector<16x16xbf16>
    %cst_16 = arith.constant dense<0.000000e+00> : vector<48x16xf32>
    %21 = tpu.matmul %0, %20, %cst_16 {dimension_numbers = #tpu.dot_dimension_numbers<[1], [0], [0], [1], [0, 0, 1, 1], [], []>} : vector<48x16xbf16>, vector<16x16xbf16>, vector<48x16xf32> -> vector<48x16xf32>
    %22 = vector.extract_strided_slice %19 {offsets = [0, 0], sizes = [16, 16], strides = [1, 1]} : vector<48x16xf32> to vector<16x16xf32>
    %23 = vector.extract_strided_slice %21 {offsets = [0, 0], sizes = [16, 16], strides = [1, 1]} : vector<48x16xf32> to vector<16x16xf32>
    %24 = vector.extract_strided_slice %19 {offsets = [16, 0], sizes = [16, 16], strides = [1, 1]} : vector<48x16xf32> to vector<16x16xf32>
    %25 = vector.extract_strided_slice %21 {offsets = [16, 0], sizes = [16, 16], strides = [1, 1]} : vector<48x16xf32> to vector<16x16xf32>
    %26 = vector.extract_strided_slice %19 {offsets = [32, 0], sizes = [16, 16], strides = [1, 1]} : vector<48x16xf32> to vector<16x16xf32>
    %27 = vector.extract_strided_slice %21 {offsets = [32, 0], sizes = [16, 16], strides = [1, 1]} : vector<48x16xf32> to vector<16x16xf32>
    %28 = arith.mulf %6, %6 : vector<16x16xf32>
    %29 = arith.truncf %28 : vector<16x16xf32> to vector<16x16xbf16>
    %cst_17 = arith.constant dense<0.000000e+00> : vector<16x16xf32>
    %30 = tpu.matmul %1, %29, %cst_17 {dimension_numbers = #tpu.dot_dimension_numbers<[1], [0], [0], [1], [0, 0, 1, 1], [], []>} : vector<16x16xbf16>, vector<16x16xbf16>, vector<16x16xf32> -> vector<16x16xf32>
    %31 = arith.mulf %8, %8 : vector<16x16xf32>
    %32 = arith.truncf %31 : vector<16x16xf32> to vector<16x16xbf16>
    %cst_18 = arith.constant dense<0.000000e+00> : vector<16x16xf32>
    %33 = tpu.matmul %1, %32, %cst_18 {dimension_numbers = #tpu.dot_dimension_numbers<[1], [0], [0], [1], [0, 0, 1, 1], [], []>} : vector<16x16xbf16>, vector<16x16xbf16>, vector<16x16xf32> -> vector<16x16xf32>
    %34 = arith.mulf %6, %8 : vector<16x16xf32>
    %35 = arith.truncf %34 : vector<16x16xf32> to vector<16x16xbf16>
    %cst_19 = arith.constant dense<0.000000e+00> : vector<16x16xf32>
    %36 = tpu.matmul %1, %35, %cst_19 {dimension_numbers = #tpu.dot_dimension_numbers<[1], [0], [0], [1], [0, 0, 1, 1], [], []>} : vector<16x16xbf16>, vector<16x16xbf16>, vector<16x16xf32> -> vector<16x16xf32>
    %37 = tpu.concatenate %22, %23, %30, %33, %36 in 0 : vector<16x16xf32>, vector<16x16xf32>, vector<16x16xf32>, vector<16x16xf32>, vector<16x16xf32> -> vector<80x16xf32>
    %38 = tpu.concatenate %24, %25 in 0 : vector<16x16xf32>, vector<16x16xf32> -> vector<32x16xf32>
    %39 = tpu.concatenate %26, %27 in 0 : vector<16x16xf32>, vector<16x16xf32> -> vector<32x16xf32>
    %40 = arith.truncf %37 : vector<80x16xf32> to vector<80x16xbf16>
    %cst_20 = arith.constant dense<0.000000e+00> : vector<80x16xf32>
    %41 = tpu.matmul %40, %2, %cst_20 {dimension_numbers = #tpu.dot_dimension_numbers<[1], [0], [0], [1], [0, 0, 1, 1], [], []>} : vector<80x16xbf16>, vector<16x16xbf16>, vector<80x16xf32> -> vector<80x16xf32>
    %42 = arith.truncf %38 : vector<32x16xf32> to vector<32x16xbf16>
    %cst_21 = arith.constant dense<0.000000e+00> : vector<32x16xf32>
    %43 = tpu.matmul %42, %3, %cst_21 {dimension_numbers = #tpu.dot_dimension_numbers<[1], [0], [0], [1], [0, 0, 1, 1], [], []>} : vector<32x16xbf16>, vector<16x16xbf16>, vector<32x16xf32> -> vector<32x16xf32>
    %44 = arith.truncf %39 : vector<32x16xf32> to vector<32x16xbf16>
    %cst_22 = arith.constant dense<0.000000e+00> : vector<32x16xf32>
    %45 = tpu.matmul %44, %4, %cst_22 {dimension_numbers = #tpu.dot_dimension_numbers<[1], [0], [0], [1], [0, 0, 1, 1], [], []>} : vector<32x16xbf16>, vector<16x16xbf16>, vector<32x16xf32> -> vector<32x16xf32>
    %46 = vector.extract_strided_slice %41 {offsets = [0, 0], sizes = [16, 16], strides = [1, 1]} : vector<80x16xf32> to vector<16x16xf32>
    %47 = vector.extract_strided_slice %41 {offsets = [16, 0], sizes = [16, 16], strides = [1, 1]} : vector<80x16xf32> to vector<16x16xf32>
    %48 = vector.extract_strided_slice %41 {offsets = [32, 0], sizes = [16, 16], strides = [1, 1]} : vector<80x16xf32> to vector<16x16xf32>
    %49 = vector.extract_strided_slice %41 {offsets = [48, 0], sizes = [16, 16], strides = [1, 1]} : vector<80x16xf32> to vector<16x16xf32>
    %50 = vector.extract_strided_slice %41 {offsets = [64, 0], sizes = [16, 16], strides = [1, 1]} : vector<80x16xf32> to vector<16x16xf32>
    %51 = arith.mulf %46, %46 : vector<16x16xf32>
    %52 = arith.mulf %47, %47 : vector<16x16xf32>
    %53 = arith.mulf %46, %47 : vector<16x16xf32>
    %54 = arith.subf %48, %51 : vector<16x16xf32>
    %55 = arith.subf %49, %52 : vector<16x16xf32>
    %56 = arith.subf %50, %53 : vector<16x16xf32>
    %cst_23 = arith.constant 2.000000e+00 : f32
    %57 = vector.broadcast %cst_23 : f32 to vector<16x16xf32>
    %58 = arith.mulf %57, %53 : vector<16x16xf32>
    %cst_24 = arith.constant 9.99999974E-5 : f32
    %59 = vector.broadcast %cst_24 : f32 to vector<16x16xf32>
    %60 = arith.addf %58, %59 : vector<16x16xf32>
    %cst_25 = arith.constant 2.000000e+00 : f32
    %61 = vector.broadcast %cst_25 : f32 to vector<16x16xf32>
    %62 = arith.mulf %61, %56 : vector<16x16xf32>
    %cst_26 = arith.constant 8.99999984E-4 : f32
    %63 = vector.broadcast %cst_26 : f32 to vector<16x16xf32>
    %64 = arith.addf %62, %63 : vector<16x16xf32>
    %65 = arith.mulf %60, %64 : vector<16x16xf32>
    %66 = arith.addf %51, %52 : vector<16x16xf32>
    %cst_27 = arith.constant 9.99999974E-5 : f32
    %67 = vector.broadcast %cst_27 : f32 to vector<16x16xf32>
    %68 = arith.addf %66, %67 : vector<16x16xf32>
    %69 = arith.addf %54, %55 : vector<16x16xf32>
    %cst_28 = arith.constant 8.99999984E-4 : f32
    %70 = vector.broadcast %cst_28 : f32 to vector<16x16xf32>
    %71 = arith.addf %69, %70 : vector<16x16xf32>
    %72 = arith.mulf %68, %71 : vector<16x16xf32>
    %73 = tpu.reciprocal %72 {approx = true} : vector<16x16xf32> -> vector<16x16xf32>
    %74 = arith.mulf %65, %73 : vector<16x16xf32>
    %75 = vector.extract_strided_slice %43 {offsets = [0, 0], sizes = [16, 16], strides = [1, 1]} : vector<32x16xf32> to vector<16x16xf32>
    %76 = math.absf %75 : vector<16x16xf32>
    %77 = vector.extract_strided_slice %45 {offsets = [0, 0], sizes = [16, 16], strides = [1, 1]} : vector<32x16xf32> to vector<16x16xf32>
    %78 = math.absf %77 : vector<16x16xf32>
    %79 = arith.addf %76, %78 : vector<16x16xf32>
    %80 = vector.extract_strided_slice %43 {offsets = [16, 0], sizes = [16, 16], strides = [1, 1]} : vector<32x16xf32> to vector<16x16xf32>
    %81 = math.absf %80 : vector<16x16xf32>
    %82 = vector.extract_strided_slice %45 {offsets = [16, 0], sizes = [16, 16], strides = [1, 1]} : vector<32x16xf32> to vector<16x16xf32>
    %83 = math.absf %82 : vector<16x16xf32>
    %84 = arith.addf %81, %83 : vector<16x16xf32>
    %cst_29 = arith.constant dense<0.000000e+00> : vector<16xf32>
    %85 = vector.multi_reduction <add>, %74, %cst_29 [0] : vector<16x16xf32> to vector<16xf32>
    %86 = vector.shape_cast %85 : vector<16xf32> to vector<1x16xf32>
    %87 = vector.shape_cast %86 : vector<1x16xf32> to vector<1x1x16xf32>
    %cst_30 = arith.constant dense<0.000000e+00> : vector<1xf32>
    %88 = vector.multi_reduction <add>, %87, %cst_30 [1, 2] : vector<1x1x16xf32> to vector<1xf32>
    %89 = vector.shape_cast %88 : vector<1xf32> to vector<1x1x1xf32>
    %90 = vector.extract %89[0, 0, 0] : f32 from vector<1x1x1xf32>
    %91 = arith.subf %79, %84 : vector<16x16xf32>
    %92 = math.absf %91 : vector<16x16xf32>
    %cst_31 = arith.constant dense<0.000000e+00> : vector<16xf32>
    %93 = vector.multi_reduction <add>, %92, %cst_31 [0] : vector<16x16xf32> to vector<16xf32>
    %94 = vector.shape_cast %93 : vector<16xf32> to vector<1x16xf32>
    %95 = vector.shape_cast %94 : vector<1x16xf32> to vector<1x1x16xf32>
    %cst_32 = arith.constant dense<0.000000e+00> : vector<1xf32>
    %96 = vector.multi_reduction <add>, %95, %cst_32 [1, 2] : vector<1x1x16xf32> to vector<1xf32>
    %97 = vector.shape_cast %96 : vector<1xf32> to vector<1x1x1xf32>
    %98 = vector.extract %97[0, 0, 0] : f32 from vector<1x1x1xf32>
    %99 = tpu.iota {dimensions = array<i32: 2>} : vector<1x8x128xi32>
    %100 = tpu.iota {dimensions = array<i32: 1>} : vector<1x8x128xi32>
    %c0_i32 = arith.constant 0 : i32
    %101 = vector.broadcast %c0_i32 : i32 to vector<1x8x128xi32>
    %102 = arith.cmpi eq, %100, %101 : vector<1x8x128xi32>
    %c0_i32_33 = arith.constant 0 : i32
    %103 = vector.broadcast %c0_i32_33 : i32 to vector<1x8x128xi32>
    %104 = arith.cmpi eq, %99, %103 : vector<1x8x128xi32>
    %105 = arith.andi %102, %104 : vector<1x8x128xi1>
    %cst_34 = arith.constant 0.000000e+00 : f32
    %106 = vector.broadcast %90 : f32 to vector<1x8x128xf32>
    %107 = vector.broadcast %cst_34 : f32 to vector<1x8x128xf32>
    %108 = arith.select %105, %106, %107 : vector<1x8x128xi1>, vector<1x8x128xf32>
    %c1_i32 = arith.constant 1 : i32
    %109 = vector.broadcast %c1_i32 : i32 to vector<1x8x128xi32>
    %110 = arith.cmpi eq, %99, %109 : vector<1x8x128xi32>
    %111 = arith.andi %102, %110 : vector<1x8x128xi1>
    %cst_35 = arith.constant 0.000000e+00 : f32
    %112 = vector.broadcast %98 : f32 to vector<1x8x128xf32>
    %113 = vector.broadcast %cst_35 : f32 to vector<1x8x128xf32>
    %114 = arith.select %111, %112, %113 : vector<1x8x128xi1>, vector<1x8x128xf32>
    %115 = arith.addf %108, %114 : vector<1x8x128xf32>
    %c2_i32 = arith.constant 2 : i32
    %116 = vector.broadcast %c2_i32 : i32 to vector<1x8x128xi32>
    %117 = arith.cmpi eq, %99, %116 : vector<1x8x128xi32>
    %118 = arith.andi %102, %117 : vector<1x8x128xi1>
    %cst_36 = arith.constant 0.000000e+00 : f32
    %119 = vector.broadcast %17 : f32 to vector<1x8x128xf32>
    %120 = vector.broadcast %cst_36 : f32 to vector<1x8x128xf32>
    %121 = arith.select %118, %119, %120 : vector<1x8x128xi1>, vector<1x8x128xf32>
    %122 = arith.addf %115, %121 : vector<1x8x128xf32>
    %c0_37 = arith.constant 0 : index
    %c0_38 = arith.constant 0 : index
    %c0_39 = arith.constant 0 : index
    %123 = vector.load %arg7[%c0_37, %c0_38, %c0_39] : memref<1x8x128xf32, #tpu.memory_space<vmem>>, vector<1x8x128xf32>
    tpu.vector_store %arg7[%c0_37, %c0_38, %c0_39], %122 {strides = array<i32>} : memref<1x8x128xf32, #tpu.memory_space<vmem>>, vector<1x8x128xf32>,
    return
  }
  func.func @transform_0(%arg0: i32) -> (i32, i32, i32) {
    %c0_i32 = arith.constant 0 : i32
    %c0_i32_0 = arith.constant 0 : i32
    %c0_i32_1 = arith.constant 0 : i32
    return %arg0, %c0_i32, %c0_i32_0 : i32, i32, i32
  }
  func.func @transform_1(%arg0: i32) -> (i32, i32, i32) {
    %c0_i32 = arith.constant 0 : i32
    %c0_i32_0 = arith.constant 0 : i32
    %c0_i32_1 = arith.constant 0 : i32
    return %arg0, %c0_i32, %c0_i32_0 : i32, i32, i32
  }
  func.func @transform_2(%arg0: i32) -> (i32, i32) {
    %c0_i32 = arith.constant 0 : i32
    %c0_i32_0 = arith.constant 0 : i32
    %c0_i32_1 = arith.constant 0 : i32
    return %c0_i32, %c0_i32_0 : i32, i32
  }
  func.func @transform_3(%arg0: i32) -> (i32, i32) {
    %c0_i32 = arith.constant 0 : i32
    %c0_i32_0 = arith.constant 0 : i32
    %c0_i32_1 = arith.constant 0 : i32
    return %c0_i32, %c0_i32_0 : i32, i32
  }
  func.func @transform_4(%arg0: i32) -> (i32, i32) {
    %c0_i32 = arith.constant 0 : i32
    %c0_i32_0 = arith.constant 0 : i32
    %c0_i32_1 = arith.constant 0 : i32
    return %c0_i32, %c0_i32_0 : i32, i32
  }
  func.func @transform_5(%arg0: i32) -> (i32, i32) {
    %c0_i32 = arith.constant 0 : i32
    %c0_i32_0 = arith.constant 0 : i32
    %c0_i32_1 = arith.constant 0 : i32
    return %c0_i32, %c0_i32_0 : i32, i32
  }
  func.func @transform_6(%arg0: i32) -> (i32, i32, i32) {
    %c0_i32 = arith.constant 0 : i32
    %c0_i32_0 = arith.constant 0 : i32
    %c0_i32_1 = arith.constant 0 : i32
    return %arg0, %c0_i32, %c0_i32_0 : i32, i32, i32
  }
}

</mosaic_0001>

<llo_original>
// kernel: total_loss.1
$region0: #{total_loss.1}
  #allocation0 [shape = 'u32[]', space=smem, size = 0x4, offset = 0x4, fixed_abs, tag = 'smem constant byte address 0x4 - core index']
  #allocation1 [shape = 'u32[72,128]{1,0:T(1,128)}', space=vmem, size = 0x9000, scoped, tag = 'internal scratch']
  %s0 = inlined_call_operand.hbm [shape: f32[2,16,16], index: 0, kind: input, shape index: {}]
  %s1 = inlined_call_operand.hbm [shape: f32[2,16,16], index: 1, kind: input, shape index: {}]
  %s2 = inlined_call_operand.hbm [shape: bf16[48,16], index: 2, kind: input, shape index: {}]
  %s3 = inlined_call_operand.hbm [shape: bf16[16,16], index: 3, kind: input, shape index: {}]
  %s4 = inlined_call_operand.hbm [shape: bf16[16,16], index: 4, kind: input, shape index: {}]
  %s5 = inlined_call_operand.vmem [shape: bf16[16,16], index: 5, kind: input, shape index: {}]
  %s6 = inlined_call_operand.vmem [shape: f32[2,8,128], index: 6, kind: output, shape index: {}]
  %s7 = sld [smem:[#allocation0]]
  $region77: #{total_loss.1} parent=0
    _
  %s9 = ssub.s32 1, %s7
  %s10 = scalar_select 0, %s9, %s7
  $region1: #{total_loss.1} parent=0
    #allocation2 [shape = 'u8[16384]{0}', space=vmem, size = 0x4000, scoped, tag = 'input window, operand 0']
    #allocation3 [shape = 's32[2]{0}', space=sflag, size = 0x8, scoped, tag = 'scoped memory for total_loss.1']
    #allocation4 [shape = 'u8[16384]{0}', space=vmem, size = 0x4000, scoped, tag = 'input window, operand 1']
    #allocation5 [shape = 's32[2]{0}', space=sflag, size = 0x8, scoped, tag = 'scoped memory for total_loss.1']
    #allocation6 [shape = 'u8[12288]{0}', space=vmem, size = 0x3000, scoped, tag = 'input window, operand 2, single buffered']
    #allocation7 [shape = 'u8[4096]{0}', space=vmem, size = 0x1000, scoped, tag = 'input window, operand 3, single buffered']
    #allocation8 [shape = 's32[1]{0}', space=sflag, size = 0x4, scoped, tag = 'scoped memory for total_loss.1']
    #allocation9 [shape = 'u8[4096]{0}', space=vmem, size = 0x1000, scoped, tag = 'input window, operand 4, single buffered']
    %11 = vsyncpa [#allocation3], 0
    %s12 = scalar_lea.sflag [#allocation3], 1
    %13 = vsyncpa %s12, 0
    %14 = vsyncpa [#allocation5], 0
    %s15 = scalar_lea.sflag [#allocation5], 1
    %16 = vsyncpa %s15, 0
    %17 = vsyncpa [#allocation8], 0
    loop: start=0, step=1, limit=4
    $region2: #{total_loss.1} parent=1 // loop_pre_header
      _
    $region3: #{total_loss.1} parent=1 // loop_header
      %s19 = sphi 0, %s23
      %p20 = scmp.ge.s32.totalorder %s19, 4
      %s29 = sphi 0, %s31
      %s32 = sphi 0, %s29
      %s33 = sphi 0, %s32
      %s49 = sphi 0, %s33
      %s55 = sphi 0, %s57
      %s58 = sphi 0, %s55
      %s59 = sphi 0, %s58
      %s75 = sphi 0, %s59
      %s79 = sphi 0, %s79
      %s81 = sphi 0, %s79
      %s82 = sphi 0, %s81
      %s96 = sphi 0, %s82
      %s100 = sphi 0, %s100
      %s102 = sphi 0, %s100
      %s103 = sphi 0, %s102
      %s117 = sphi 0, %s103
      %s121 = sphi 0, %s121
      %s123 = sphi 0, %s121
      %s124 = sphi 0, %s123
      %s138 = sphi 0, %s124
      %s142 = sphi 0, %s142
      %s144 = sphi 0, %s142
      %s145 = sphi 0, %s144
      %s159 = sphi 0, %s145
      %s165 = sphi 0, %s167
      %s168 = sphi 0, %s165
      %s169 = sphi 0, %s168
      %s185 = sphi 0, %s169
    $region4: #{total_loss.1} parent=1 // loop_header_branch
      %22 = sbr.rel (%p20) target = $region8
    $region5: #{total_loss.1} parent=1 // loop_body
      %s24 = ssub.s32 %s19, 1
      %s25 = ssub.s32 %s19, 2
      %s26 = sadd.s32 %s19, 1
      %s27 = ssub.s32 %s19, %s26
      %p28 = scmp.eq.s32.totalorder %s27, 0
      %s30 = sadd.s32 %s29, 1
      %s31 = scalar_select %p28, %s29, %s30
      %p34 = pneg %p28
      %p35 = scmp.eq.s32.totalorder %s19, 1
      %p36 = por %p34, %p35
      %p37 = scmp.ne.s32.totalorder %s29, %s32
      %p38 = scmp.eq.s32.totalorder %s19, 0
      %p39 = por %p37, %p38
      %p40 = scmp.ne.s32.totalorder %s29, %s32
      %p41 = scmp.eq.s32.totalorder %s24, 1
      %p42 = por %p40, %p41
      %p43 = scmp.ne.s32.totalorder %s32, %s33
      %p44 = scmp.eq.s32.totalorder %s24, 0
      %p45 = por %p43, %p44
      %p46 = scmp.ne.s32.totalorder %s32, %s33
      %p47 = scmp.eq.s32.totalorder %s25, 1
      %p48 = por %p46, %p47
      %p50 = scmp.ne.s32.totalorder %s33, %s49
      %p51 = scmp.eq.s32.totalorder %s25, 0
      %p52 = por %p50, %p51
      %s53 = ssub.s32 %s19, %s26
      %p54 = scmp.eq.s32.totalorder %s53, 0
      %s56 = sadd.s32 %s55, 1
      %s57 = scalar_select %p54, %s55, %s56
      %p60 = pneg %p54
      %p61 = scmp.eq.s32.totalorder %s19, 1
      %p62 = por %p60, %p61
      %p63 = scmp.ne.s32.totalorder %s55, %s58
      %p64 = scmp.eq.s32.totalorder %s19, 0
      %p65 = por %p63, %p64
      %p66 = scmp.ne.s32.totalorder %s55, %s58
      %p67 = scmp.eq.s32.totalorder %s24, 1
      %p68 = por %p66, %p67
      %p69 = scmp.ne.s32.totalorder %s58, %s59
      %p70 = scmp.eq.s32.totalorder %s24, 0
      %p71 = por %p69, %p70
      %p72 = scmp.ne.s32.totalorder %s58, %s59
      %p73 = scmp.eq.s32.totalorder %s25, 1
      %p74 = por %p72, %p73
      %p76 = scmp.ne.s32.totalorder %s59, %s75
      %p77 = scmp.eq.s32.totalorder %s25, 0
      %p78 = por %p76, %p77
      %s80 = sadd.s32 %s79, 1
      %p83 = scmp.eq.s32.totalorder %s19, 1
      %p84 = scmp.ne.s32.totalorder %s79, %s81
      %p85 = scmp.eq.s32.totalorder %s19, 0
      %p86 = por %p84, %p85
      %p87 = scmp.ne.s32.totalorder %s79, %s81
      %p88 = scmp.eq.s32.totalorder %s24, 1
      %p89 = por %p87, %p88
      %p90 = scmp.ne.s32.totalorder %s81, %s82
      %p91 = scmp.eq.s32.totalorder %s24, 0
      %p92 = por %p90, %p91
      %p93 = scmp.ne.s32.totalorder %s81, %s82
      %p94 = scmp.eq.s32.totalorder %s25, 1
      %p95 = por %p93, %p94
      %p97 = scmp.ne.s32.totalorder %s82, %s96
      %p98 = scmp.eq.s32.totalorder %s25, 0
      %p99 = por %p97, %p98
      %s101 = sadd.s32 %s100, 1
      %p104 = scmp.eq.s32.totalorder %s19, 1
      %p105 = scmp.ne.s32.totalorder %s100, %s102
      %p106 = scmp.eq.s32.totalorder %s19, 0
      %p107 = por %p105, %p106
      %p108 = scmp.ne.s32.totalorder %s100, %s102
      %p109 = scmp.eq.s32.totalorder %s24, 1
      %p110 = por %p108, %p109
      %p111 = scmp.ne.s32.totalorder %s102, %s103
      %p112 = scmp.eq.s32.totalorder %s24, 0
      %p113 = por %p111, %p112
      %p114 = scmp.ne.s32.totalorder %s102, %s103
      %p115 = scmp.eq.s32.totalorder %s25, 1
      %p116 = por %p114, %p115
      %p118 = scmp.ne.s32.totalorder %s103, %s117
      %p119 = scmp.eq.s32.totalorder %s25, 0
      %p120 = por %p118, %p119
      %s122 = sadd.s32 %s121, 1
      %p125 = scmp.eq.s32.totalorder %s19, 1
      %p126 = scmp.ne.s32.totalorder %s121, %s123
      %p127 = scmp.eq.s32.totalorder %s19, 0
      %p128 = por %p126, %p127
      %p129 = scmp.ne.s32.totalorder %s121, %s123
      %p130 = scmp.eq.s32.totalorder %s24, 1
      %p131 = por %p129, %p130
      %p132 = scmp.ne.s32.totalorder %s123, %s124
      %p133 = scmp.eq.s32.totalorder %s24, 0
      %p134 = por %p132, %p133
      %p135 = scmp.ne.s32.totalorder %s123, %s124
      %p136 = scmp.eq.s32.totalorder %s25, 1
      %p137 = por %p135, %p136
      %p139 = scmp.ne.s32.totalorder %s124, %s138
      %p140 = scmp.eq.s32.totalorder %s25, 0
      %p141 = por %p139, %p140
      %s143 = sadd.s32 %s142, 1
      %p146 = scmp.eq.s32.totalorder %s19, 1
      %p147 = scmp.ne.s32.totalorder %s142, %s144
      %p148 = scmp.eq.s32.totalorder %s19, 0
      %p149 = por %p147, %p148
      %p150 = scmp.ne.s32.totalorder %s142, %s144
      %p151 = scmp.eq.s32.totalorder %s24, 1
      %p152 = por %p150, %p151
      %p153 = scmp.ne.s32.totalorder %s144, %s145
      %p154 = scmp.eq.s32.totalorder %s24, 0
      %p155 = por %p153, %p154
      %p156 = scmp.ne.s32.totalorder %s144, %s145
      %p157 = scmp.eq.s32.totalorder %s25, 1
      %p158 = por %p156, %p157
      %p160 = scmp.ne.s32.totalorder %s145, %s159
      %p161 = scmp.eq.s32.totalorder %s25, 0
      %p162 = por %p160, %p161
      %s163 = ssub.s32 %s19, %s26
      %p164 = scmp.eq.s32.totalorder %s163, 0
      %s166 = sadd.s32 %s165, 1
      %s167 = scalar_select %p164, %s165, %s166
      %p170 = pneg %p164
      %p171 = scmp.eq.s32.totalorder %s19, 1
      %p172 = por %p170, %p171
      %p173 = scmp.ne.s32.totalorder %s165, %s168
      %p174 = scmp.eq.s32.totalorder %s19, 0
      %p175 = por %p173, %p174
      %p176 = scmp.ne.s32.totalorder %s165, %s168
      %p177 = scmp.eq.s32.totalorder %s24, 1
      %p178 = por %p176, %p177
      %p179 = scmp.ne.s32.totalorder %s168, %s169
      %p180 = scmp.eq.s32.totalorder %s24, 0
      %p181 = por %p179, %p180
      %p182 = scmp.ne.s32.totalorder %s168, %s169
      %p183 = scmp.eq.s32.totalorder %s25, 1
      %p184 = por %p182, %p183
      %p186 = scmp.ne.s32.totalorder %s169, %s185
      %p187 = scmp.eq.s32.totalorder %s25, 0
      %p188 = por %p186, %p187
      %p189 = scmp.le.s32.totalorder 1, %s19
      %p190 = scmp.lt.s32.totalorder %s19, 3
      %p191 = pnand %p189, %p190
      %p192 = pneg %p191
      // Predicated region
      $region9: #{total_loss.1} parent=5 // pred_check
        _
      $region10: #{total_loss.1} parent=5 // pred_check_branch
        %194 = sbr.rel (%p191) target = $region12
      $region11: #{total_loss.1} parent=5 // pred_region
        %s195 = ssub.s32 %s19, 1
        // Predicated region
        $region13: #{total_loss.1} parent=11 // pred_check
          %p196 = pneg %p92
        $region14: #{total_loss.1} parent=11 // pred_check_branch
          %198 = sbr.rel (%p196) target = $region16
        $region15: #{total_loss.1} parent=11 // pred_region
          %200 = vsyncadd [#allocation5], 0
          %s201 = sshll.u32 %s2, 4
          %s202 = int_to_ptr.hbm [resolvable:$true] %s201
          %s203 = sshll.u32 [#allocation6], 4
          %s204 = int_to_ptr.vmem [resolvable:$true] %s203
          %209 = dma.hbm_to_vmem [thread:$0]  %s202, 384, %s204, [#allocation5], 64, 64, 4
        $region16: #{total_loss.1} parent=11 // pred_fallthru
          _
        // Predicated region
        $region17: #{total_loss.1} parent=11 // pred_check
          %p210 = pneg %p113
        $region18: #{total_loss.1} parent=11 // pred_check_branch
          %212 = sbr.rel (%p210) target = $region20
        $region19: #{total_loss.1} parent=11 // pred_region
          %214 = vsyncadd [#allocation8], 0
          %s215 = sshll.u32 %s3, 4
          %s216 = int_to_ptr.hbm [resolvable:$true] %s215
          %s217 = sshll.u32 [#allocation7], 4
          %s218 = int_to_ptr.vmem [resolvable:$true] %s217
          %223 = dma.hbm_to_vmem [thread:$0]  %s216, 128, %s218, [#allocation8], 64, 64, 4
        $region20: #{total_loss.1} parent=11 // pred_fallthru
          _
        // Predicated region
        $region21: #{total_loss.1} parent=11 // pred_check
          %p224 = pneg %p134
        $region22: #{total_loss.1} parent=11 // pred_check_branch
          %226 = sbr.rel (%p224) target = $region24
        $region23: #{total_loss.1} parent=11 // pred_region
          %228 = vsyncadd [#allocation8], 0
          %s229 = sshll.u32 %s4, 4
          %s230 = int_to_ptr.hbm [resolvable:$true] %s229
          %s231 = sshll.u32 [#allocation9], 4
          %s232 = int_to_ptr.vmem [resolvable:$true] %s231
          %237 = dma.hbm_to_vmem [thread:$0]  %s230, 128, %s232, [#allocation8], 64, 64, 4
        $region24: #{total_loss.1} parent=11 // pred_fallthru
          _
        // Predicated region
        $region25: #{total_loss.1} parent=11 // pred_check
          %p238 = pneg %p155
        $region26: #{total_loss.1} parent=11 // pred_check_branch
          %240 = sbr.rel (%p238) target = $region28
        $region27: #{total_loss.1} parent=11 // pred_region
          _
        $region28: #{total_loss.1} parent=11 // pred_fallthru
          _
      $region12: #{total_loss.1} parent=5 // pred_fallthru
        _
      %p241 = scmp.lt.s32.totalorder %s19, 2
      // Predicated region
      $region29: #{total_loss.1} parent=5 // pred_check
        %p242 = pneg %p241
      $region30: #{total_loss.1} parent=5 // pred_check_branch
        %244 = sbr.rel (%p242) target = $region32
      $region31: #{total_loss.1} parent=5 // pred_region
        // Predicated region
        $region33: #{total_loss.1} parent=31 // pred_check
          %p245 = pneg %p39
        $region34: #{total_loss.1} parent=31 // pred_check_branch
          %247 = sbr.rel (%p245) target = $region36
        $region35: #{total_loss.1} parent=31 // pred_region
          %s248 = sand.u32 %s29, 1
          %s249 = scalar_lea.sflag [#allocation3], %s248
          %s250 = sand.u32 %s29, 1
          %s251 = smul.addr %s250, 16
          %s252 = scalar_lea.vmem [#allocation2], %s251
          %254 = vsyncadd %s249, 0
          %s255 = smul.addr %s19, 2
          %s256 = smul.addr %s255, 8
          %s257 = scalar_lea.hbm %s0, %s256
          %s258 = sshll.u32 %s257, 4
          %s259 = int_to_ptr.hbm [resolvable:$true] %s258
          %s260 = sshll.u32 %s252, 4
          %s261 = int_to_ptr.vmem [resolvable:$true] %s260
          %266 = dma.hbm_to_vmem [thread:$0]  %s259, 256, %s261, %s249, 128, 128, 8
        $region36: #{total_loss.1} parent=31 // pred_fallthru
          _
        // Predicated region
        $region37: #{total_loss.1} parent=31 // pred_check
          %p267 = pneg %p65
        $region38: #{total_loss.1} parent=31 // pred_check_branch
          %269 = sbr.rel (%p267) target = $region40
        $region39: #{total_loss.1} parent=31 // pred_region
          %s270 = sand.u32 %s19, 1
          %s271 = scalar_lea.sflag [#allocation5], %s270
          %s272 = sand.u32 %s55, 1
          %s273 = smul.addr %s272, 16
          %s274 = scalar_lea.vmem [#allocation4], %s273
          %276 = vsyncadd %s271, 0
          %s277 = smul.addr %s19, 2
          %s278 = smul.addr %s277, 8
          %s279 = scalar_lea.hbm %s1, %s278
          %s280 = sshll.u32 %s279, 4
          %s281 = int_to_ptr.hbm [resolvable:$true] %s280
          %s282 = sshll.u32 %s274, 4
          %s283 = int_to_ptr.vmem [resolvable:$true] %s282
          %288 = dma.hbm_to_vmem [thread:$0]  %s281, 256, %s283, %s271, 128, 128, 8
        $region40: #{total_loss.1} parent=31 // pred_fallthru
          _
      $region32: #{total_loss.1} parent=5 // pred_fallthru
        _
      %p289 = scmp.le.s32.totalorder 1, %s19
      %p290 = scmp.lt.s32.totalorder %s19, 3
      %p291 = pnand %p289, %p290
      %p292 = pneg %p291
      // Predicated region
      $region41: #{total_loss.1} parent=5 // pred_check
        _
      $region42: #{total_loss.1} parent=5 // pred_check_branch
        %294 = sbr.rel (%p291) target = $region44
      $region43: #{total_loss.1} parent=5 // pred_region
        %s295 = ssub.s32 %s19, 1
        %s296 = sand.u32 %s32, 1
        %s297 = scalar_lea.sflag [#allocation3], %s296
        %s298 = sand.u32 %s32, 1
        %s299 = smul.addr %s298, 16
        %s300 = scalar_lea.vmem [#allocation2], %s299
        // Predicated region
        $region45: #{total_loss.1} parent=43 // pred_check
          %p301 = pneg %p45
        $region46: #{total_loss.1} parent=43 // pred_check_branch
          %303 = sbr.rel (%p301) target = $region48
        $region47: #{total_loss.1} parent=43 // pred_region
          %305 = dma.done %s297, 256
        $region48: #{total_loss.1} parent=43 // pred_fallthru
          _
        %s306 = sand.u32 %s24, 1
        %s307 = scalar_lea.sflag [#allocation5], %s306
        %s308 = sand.u32 %s58, 1
        %s309 = smul.addr %s308, 16
        %s310 = scalar_lea.vmem [#allocation4], %s309
        // Predicated region
        $region49: #{total_loss.1} parent=43 // pred_check
          %p311 = pneg %p71
        $region50: #{total_loss.1} parent=43 // pred_check_branch
          %313 = sbr.rel (%p311) target = $region52
        $region51: #{total_loss.1} parent=43 // pred_region
          %315 = dma.done %s307, 256
        $region52: #{total_loss.1} parent=43 // pred_fallthru
          _
        // Predicated region
        $region53: #{total_loss.1} parent=43 // pred_check
          %p316 = pneg %p92
        $region54: #{total_loss.1} parent=43 // pred_check_branch
          %318 = sbr.rel (%p316) target = $region56
        $region55: #{total_loss.1} parent=43 // pred_region
          %320 = dma.done [#allocation5], 384
        $region56: #{total_loss.1} parent=43 // pred_fallthru
          _
        // Predicated region
        $region57: #{total_loss.1} parent=43 // pred_check
          %p321 = pneg %p113
        $region58: #{total_loss.1} parent=43 // pred_check_branch
          %323 = sbr.rel (%p321) target = $region60
        $region59: #{total_loss.1} parent=43 // pred_region
          %325 = dma.done [#allocation8], 128
        $region60: #{total_loss.1} parent=43 // pred_fallthru
          _
        // Predicated region
        $region61: #{total_loss.1} parent=43 // pred_check
          %p326 = pneg %p134
        $region62: #{total_loss.1} parent=43 // pred_check_branch
          %328 = sbr.rel (%p326) target = $region64
        $region63: #{total_loss.1} parent=43 // pred_region
          %330 = dma.done [#allocation8], 128
        $region64: #{total_loss.1} parent=43 // pred_fallthru
          _
        %s331 = sand.u32 %s32, 1
        %s332 = scalar_lea.sflag [#allocation3], %s331
        %s333 = sand.u32 %s32, 1
        %s334 = smul.addr %s333, 16
        %s335 = scalar_lea.vmem [#allocation2], %s334
        %p336 = pneg %p45
        %p337 = pneg %p42
        %s338 = sand.u32 %s24, 1
        %s339 = scalar_lea.sflag [#allocation5], %s338
        %s340 = sand.u32 %s58, 1
        %s341 = smul.addr %s340, 16
        %s342 = scalar_lea.vmem [#allocation4], %s341
        %p343 = pneg %p71
        %p344 = pneg %p68
        %p345 = pneg %p92
        %p346 = pneg %p89
        %p347 = pneg %p113
        %p348 = pneg %p110
        %p349 = pneg %p134
        %p350 = pneg %p131
        %p351 = pneg %p155
        %p352 = pneg %p152
        %p353 = pneg %p181
        %p354 = pneg %p178
        %p355 = scmp.lt.s32.totalorder %s24, 1
        %s356 = scalar_select %p355, %s24, 1
        %s357 = smul.addr %s356, 8
        %s358 = scalar_lea.vmem %s6, %s357
        %p359 = scmp.lt.s32.totalorder %s24, 1
        %s360 = scalar_select %p359, %s24, 1
        %s361 = smul.addr %s360, 8
        %s362 = scalar_lea.vmem %s6, %s361
        %v364 = vld [vmem:[#allocation6] sm:$0xf]
        %v365 = vld [vmem:[#allocation6 + $0x4] sm:$0xf]
        %v366 = vld [vmem:[#allocation6 + $0x8] sm:$0xf]
        %v367 = vld [vmem:[#allocation6 + $0xc] sm:$0xf]
        %v368 = vld [vmem:[#allocation6 + $0x10] sm:$0xf]
        %v369 = vld [vmem:[#allocation6 + $0x14] sm:$0xf]
        %v370 = vld [vmem:[#allocation7] sm:$0xf]
        %v371 = vld [vmem:[#allocation7 + $0x4] sm:$0xf]
        %v372 = vld [vmem:[#allocation9] sm:$0xf]
        %v373 = vld [vmem:[#allocation9 + $0x4] sm:$0xf]
        %v374 = vld [vmem:[%s5] sm:$0xf]
        %v375 = vld [vmem:[%s5 + $0x4] sm:$0xf]
        %v376 = vld [vmem:[%s300] sm:$0xff]
        %v377 = vld [vmem:[%s300 + $0x8] sm:$0xff]
        %v378 = vld [vmem:[%s310] sm:$0xff]
        %v379 = vld [vmem:[%s310 + $0x8] sm:$0xff]
        %v380 = vsub.f32 %v376, %v378
        %v381 = vsub.f32 %v377, %v379
        %v382 = vand.u32 2147483647, %v380
        %v383 = vand.u32 2147483647, %v381
        %vm384 = vcmask 130048
        %v385 = vsel %vm384, %v382, 0.0
        %v386 = vsel %vm384, %v383, 0.0
        %v387 = vadd.f32 %v385, %v386
        %v388 = vrot.slane %v387, 4
        %v389 = vadd.f32 %v387, %v388
        %v390 = vrot.slane %v389, 2
        %v391 = vadd.f32 %v389, %v390
        %v392 = vrot.slane %v391, 1
        %v393 = vadd.f32 %v391, %v392
        %vm394 = vcmask 122880
        %v395 = vsel %vm394, %v393, 0.0
        %396 = vadd.xlane.f32.xlu0 %v395
        %v397 = vpop.xlane.xlu0 %396
        %v398 = vrot.slane %v397, 4
        %v399 = vadd.f32 %v397, %v398
        %v400 = vrot.slane %v399, 2
        %v401 = vadd.f32 %v399, %v400
        %v402 = vrot.slane %v401, 1
        %v403 = vadd.f32 %v401, %v402
        %s404 = vtos %v403
        %s405 = sadd.f32 %s404, 0.0
        %v406 = vpack.c.bf16 %v377, %v376
        %v413 = vunpack.c.l.b16 %v364
        %v414 = vunpack.c.l.b16 %v365
        %v415 = vunpack.c.l.b16 %v366
        %v416 = vunpack.c.l.b16 %v367
        %v417 = vunpack.c.l.b16 %v368
        %v418 = vunpack.c.l.b16 %v369
        %v419 = vpack.c.b16 %v414, %v413
        %v420 = vpack.c.b16 %v416, %v415
        %v421 = vpack.c.b16 %v418, %v417
        %v423 = vsel %vm384, %v419, 0
        %v426 = vsel %vm384, %v420, 0
        %v429 = vsel %vm384, %v421, 0
        %431 = vmatpush.bf16.msra.mxu0 0
        %432 = vmatpush.bf16.msra.mxu0 0
        %433 = vmatpush.bf16.msra.mxu0 0
        %434 = vmatpush.bf16.msra.mxu0 0
        %435 = vmatpush.bf16.msra.mxu0 0
        %436 = vmatpush.bf16.msra.mxu0 0
        %437 = vmatpush.bf16.msra.mxu0 0
        %438 = vmatpush.bf16.msra.mxu0 %v406
        %439 = vmatmul.bf16.gmra.mxu0 %v423
        %v440 = vpop.f32.mrf.mxu0
        %v441 = vadd.f32 0.0, %v440
        %v442 = vpop.f32.mrf.mxu0
        %v443 = vadd.f32 0.0, %v442
        %444 = vmatmul.bf16.gmra.mxu0 %v426
        %v445 = vpop.f32.mrf.mxu0
        %v446 = vadd.f32 0.0, %v445
        %v447 = vpop.f32.mrf.mxu0
        %v448 = vadd.f32 0.0, %v447
        %449 = vmatmul.bf16.gmra.mxu0 %v429
        %v450 = vpop.f32.mrf.mxu0
        %v451 = vadd.f32 0.0, %v450
        %v452 = vpop.f32.mrf.mxu0
        %v453 = vadd.f32 0.0, %v452
        %454 = vdwg.mxu0
        %v455 = vpack.c.bf16 %v379, %v378
        %456 = vmatpush.bf16.msra.mxu0 0
        %457 = vmatpush.bf16.msra.mxu0 0
        %458 = vmatpush.bf16.msra.mxu0 0
        %459 = vmatpush.bf16.msra.mxu0 0
        %460 = vmatpush.bf16.msra.mxu0 0
        %461 = vmatpush.bf16.msra.mxu0 0
        %462 = vmatpush.bf16.msra.mxu0 0
        %463 = vmatpush.bf16.msra.mxu0 %v455
        %464 = vmatmul.bf16.gmra.mxu0 %v423
        %v465 = vpop.f32.mrf.mxu0
        %v466 = vadd.f32 0.0, %v465
        %v467 = vpop.f32.mrf.mxu0
        %v468 = vadd.f32 0.0, %v467
        %469 = vmatmul.bf16.gmra.mxu0 %v426
        %v470 = vpop.f32.mrf.mxu0
        %v471 = vadd.f32 0.0, %v470
        %v472 = vpop.f32.mrf.mxu0
        %v473 = vadd.f32 0.0, %v472
        %474 = vmatmul.bf16.gmra.mxu0 %v429
        %v475 = vpop.f32.mrf.mxu0
        %v476 = vadd.f32 0.0, %v475
        %v477 = vpop.f32.mrf.mxu0
        %v478 = vadd.f32 0.0, %v477
        %479 = vdwg.mxu0
        %v480 = vmul.f32 %v376, %v376
        %v481 = vmul.f32 %v377, %v377
        %v482 = vpack.c.bf16 %v481, %v480
        %483 = vmatpush.bf16.msra.mxu0 0
        %484 = vmatpush.bf16.msra.mxu0 0
        %485 = vmatpush.bf16.msra.mxu0 0
        %486 = vmatpush.bf16.msra.mxu0 0
        %487 = vmatpush.bf16.msra.mxu0 0
        %488 = vmatpush.bf16.msra.mxu0 0
        %489 = vmatpush.bf16.msra.mxu0 0
        %490 = vmatpush.bf16.msra.mxu0 %v482
        %491 = vmatmul.bf16.gmra.mxu0 %v423
        %v492 = vpop.f32.mrf.mxu0
        %v493 = vadd.f32 0.0, %v492
        %v494 = vpop.f32.mrf.mxu0
        %v495 = vadd.f32 0.0, %v494
        %496 = vdwg.mxu0
        %v497 = vmul.f32 %v378, %v378
        %v498 = vmul.f32 %v379, %v379
        %v499 = vpack.c.bf16 %v498, %v497
        %500 = vmatpush.bf16.msra.mxu0 0
        %501 = vmatpush.bf16.msra.mxu0 0
        %502 = vmatpush.bf16.msra.mxu0 0
        %503 = vmatpush.bf16.msra.mxu0 0
        %504 = vmatpush.bf16.msra.mxu0 0
        %505 = vmatpush.bf16.msra.mxu0 0
        %506 = vmatpush.bf16.msra.mxu0 0
        %507 = vmatpush.bf16.msra.mxu0 %v499
        %508 = vmatmul.bf16.gmra.mxu0 %v423
        %v509 = vpop.f32.mrf.mxu0
        %v510 = vadd.f32 0.0, %v509
        %v511 = vpop.f32.mrf.mxu0
        %v512 = vadd.f32 0.0, %v511
        %513 = vdwg.mxu0
        %v514 = vmul.f32 %v376, %v378
        %v515 = vmul.f32 %v377, %v379
        %v516 = vpack.c.bf16 %v515, %v514
        %517 = vmatpush.bf16.msra.mxu0 0
        %518 = vmatpush.bf16.msra.mxu0 0
        %519 = vmatpush.bf16.msra.mxu0 0
        %520 = vmatpush.bf16.msra.mxu0 0
        %521 = vmatpush.bf16.msra.mxu0 0
        %522 = vmatpush.bf16.msra.mxu0 0
        %523 = vmatpush.bf16.msra.mxu0 0
        %524 = vmatpush.bf16.msra.mxu0 %v516
        %525 = vmatmul.bf16.gmra.mxu0 %v423
        %v526 = vpop.f32.mrf.mxu0
        %v527 = vadd.f32 0.0, %v526
        %v528 = vpop.f32.mrf.mxu0
        %v529 = vadd.f32 0.0, %v528
        %530 = vdwg.mxu0
        %v531 = vpack.c.bf16 %v443, %v441
        %v532 = vpack.c.bf16 %v468, %v466
        %v533 = vpack.c.bf16 %v495, %v493
        %v534 = vpack.c.bf16 %v512, %v510
        %v535 = vpack.c.bf16 %v529, %v527
        %v538 = vunpack.c.l.b16 %v370
        %v539 = vunpack.c.l.b16 %v371
        %v540 = vpack.c.b16 %v539, %v538
        %v543 = vsel %vm384, %v531, 0
        %v546 = vsel %vm384, %v532, 0
        %v549 = vsel %vm384, %v533, 0
        %v552 = vsel %vm384, %v534, 0
        %v555 = vsel %vm384, %v535, 0
        %557 = vmatpush.bf16.msra.mxu0 0
        %558 = vmatpush.bf16.msra.mxu0 0
        %559 = vmatpush.bf16.msra.mxu0 0
        %560 = vmatpush.bf16.msra.mxu0 0
        %561 = vmatpush.bf16.msra.mxu0 0
        %562 = vmatpush.bf16.msra.mxu0 0
        %563 = vmatpush.bf16.msra.mxu0 0
        %564 = vmatpush.bf16.msra.mxu0 %v540
        %565 = vmatmul.bf16.gmra.mxu0 %v543
        %v566 = vpop.f32.mrf.mxu0
        %v567 = vadd.f32 0.0, %v566
        %v568 = vpop.f32.mrf.mxu0
        %v569 = vadd.f32 0.0, %v568
        %570 = vmatmul.bf16.gmra.mxu0 %v546
        %v571 = vpop.f32.mrf.mxu0
        %v572 = vadd.f32 0.0, %v571
        %v573 = vpop.f32.mrf.mxu0
        %v574 = vadd.f32 0.0, %v573
        %575 = vmatmul.bf16.gmra.mxu0 %v549
        %v576 = vpop.f32.mrf.mxu0
        %v577 = vadd.f32 0.0, %v576
        %v578 = vpop.f32.mrf.mxu0
        %v579 = vadd.f32 0.0, %v578
        %580 = vmatmul.bf16.gmra.mxu0 %v552
        %v581 = vpop.f32.mrf.mxu0
        %v582 = vadd.f32 0.0, %v581
        %v583 = vpop.f32.mrf.mxu0
        %v584 = vadd.f32 0.0, %v583
        %585 = vmatmul.bf16.gmra.mxu0 %v555
        %v586 = vpop.f32.mrf.mxu0
        %v587 = vadd.f32 0.0, %v586
        %v588 = vpop.f32.mrf.mxu0
        %v589 = vadd.f32 0.0, %v588
        %590 = vdwg.mxu0
        %v591 = vpack.c.bf16 %v448, %v446
        %v592 = vpack.c.bf16 %v473, %v471
        %v595 = vunpack.c.l.b16 %v372
        %v596 = vunpack.c.l.b16 %v373
        %v597 = vpack.c.b16 %v596, %v595
        %v600 = vsel %vm384, %v591, 0
        %v603 = vsel %vm384, %v592, 0
        %605 = vmatpush.bf16.msra.mxu0 0
        %606 = vmatpush.bf16.msra.mxu0 0
        %607 = vmatpush.bf16.msra.mxu0 0
        %608 = vmatpush.bf16.msra.mxu0 0
        %609 = vmatpush.bf16.msra.mxu0 0
        %610 = vmatpush.bf16.msra.mxu0 0
        %611 = vmatpush.bf16.msra.mxu0 0
        %612 = vmatpush.bf16.msra.mxu0 %v597
        %613 = vmatmul.bf16.gmra.mxu0 %v600
        %v614 = vpop.f32.mrf.mxu0
        %v615 = vadd.f32 0.0, %v614
        %v616 = vpop.f32.mrf.mxu0
        %v617 = vadd.f32 0.0, %v616
        %618 = vmatmul.bf16.gmra.mxu0 %v603
        %v619 = vpop.f32.mrf.mxu0
        %v620 = vadd.f32 0.0, %v619
        %v621 = vpop.f32.mrf.mxu0
        %v622 = vadd.f32 0.0, %v621
        %623 = vdwg.mxu0
        %v624 = vpack.c.bf16 %v453, %v451
        %v625 = vpack.c.bf16 %v478, %v476
        %v628 = vunpack.c.l.b16 %v374
        %v629 = vunpack.c.l.b16 %v375
        %v630 = vpack.c.b16 %v629, %v628
        %v633 = vsel %vm384, %v624, 0
        %v636 = vsel %vm384, %v625, 0
        %638 = vmatpush.bf16.msra.mxu0 0
        %639 = vmatpush.bf16.msra.mxu0 0
        %640 = vmatpush.bf16.msra.mxu0 0
        %641 = vmatpush.bf16.msra.mxu0 0
        %642 = vmatpush.bf16.msra.mxu0 0
        %643 = vmatpush.bf16.msra.mxu0 0
        %644 = vmatpush.bf16.msra.mxu0 0
        %645 = vmatpush.bf16.msra.mxu0 %v630
        %646 = vmatmul.bf16.gmra.mxu0 %v633
        %v647 = vpop.f32.mrf.mxu0
        %v648 = vadd.f32 0.0, %v647
        %v649 = vpop.f32.mrf.mxu0
        %v650 = vadd.f32 0.0, %v649
        %651 = vmatmul.bf16.gmra.mxu0 %v636
        %v652 = vpop.f32.mrf.mxu0
        %v653 = vadd.f32 0.0, %v652
        %v654 = vpop.f32.mrf.mxu0
        %v655 = vadd.f32 0.0, %v654
        %656 = vdwg.mxu0
        %v657 = vmul.f32 %v567, %v567
        %v658 = vmul.f32 %v569, %v569
        %v659 = vmul.f32 %v572, %v572
        %v660 = vmul.f32 %v574, %v574
        %v661 = vmul.f32 %v567, %v572
        %v662 = vmul.f32 %v569, %v574
        %v663 = vsub.f32 %v577, %v657
        %v664 = vsub.f32 %v579, %v658
        %v665 = vsub.f32 %v582, %v659
        %v666 = vsub.f32 %v584, %v660
        %v667 = vsub.f32 %v587, %v661
        %v668 = vsub.f32 %v589, %v662
        %v669 = vmul.f32 %v661, 2.0
        %v670 = vmul.f32 %v662, 2.0
        %v671 = vadd.f32 %v669, 0.0001
        %v672 = vadd.f32 %v670, 0.0001
        %v673 = vmul.f32 %v667, 2.0
        %v674 = vmul.f32 %v668, 2.0
        %v675 = vadd.f32 %v673, 0.0009
        %v676 = vadd.f32 %v674, 0.0009
        %v677 = vmul.f32 %v671, %v675
        %v678 = vmul.f32 %v672, %v676
        %v679 = vadd.f32 %v657, %v659
        %v680 = vadd.f32 %v658, %v660
        %v681 = vadd.f32 %v679, 0.0001
        %v682 = vadd.f32 %v680, 0.0001
        %v683 = vadd.f32 %v663, %v665
        %v684 = vadd.f32 %v664, %v666
        %v685 = vadd.f32 %v683, 0.0009
        %v686 = vadd.f32 %v684, 0.0009
        %v687 = vmul.f32 %v681, %v685
        %v688 = vmul.f32 %v682, %v686
        %v689 = vrcp.pop %v687
        %v690 = vrcp.pop %v688
        %v691 = vmul.f32 %v677, %v689
        %v692 = vmul.f32 %v678, %v690
        %v693 = vand.u32 2147483647, %v615
        %v694 = vand.u32 2147483647, %v617
        %v695 = vand.u32 2147483647, %v648
        %v696 = vand.u32 2147483647, %v650
        %v697 = vadd.f32 %v693, %v695
        %v698 = vadd.f32 %v694, %v696
        %v699 = vand.u32 2147483647, %v620
        %v700 = vand.u32 2147483647, %v622
        %v701 = vand.u32 2147483647, %v653
        %v702 = vand.u32 2147483647, %v655
        %v703 = vadd.f32 %v699, %v701
        %v704 = vadd.f32 %v700, %v702
        %v705 = vsel %vm384, %v691, 0.0
        %v706 = vsel %vm384, %v692, 0.0
        %v707 = vadd.f32 %v705, %v706
        %v708 = vrot.slane %v707, 4
        %v709 = vadd.f32 %v707, %v708
        %v710 = vrot.slane %v709, 2
        %v711 = vadd.f32 %v709, %v710
        %v712 = vrot.slane %v711, 1
        %v713 = vadd.f32 %v711, %v712
        %v714 = vsel %vm394, %v713, 0.0
        %715 = vadd.xlane.f32.xlu0 %v714
        %v716 = vpop.xlane.xlu0 %715
        %v717 = vrot.slane %v716, 4
        %v718 = vadd.f32 %v716, %v717
        %v719 = vrot.slane %v718, 2
        %v720 = vadd.f32 %v718, %v719
        %v721 = vrot.slane %v720, 1
        %v722 = vadd.f32 %v720, %v721
        %s723 = vtos %v722
        %v724 = vsub.f32 %v697, %v703
        %v725 = vsub.f32 %v698, %v704
        %v726 = vand.u32 2147483647, %v724
        %v727 = vand.u32 2147483647, %v725
        %v728 = vsel %vm384, %v726, 0.0
        %v729 = vsel %vm384, %v727, 0.0
        %v730 = vadd.f32 %v728, %v729
        %v731 = vrot.slane %v730, 4
        %v732 = vadd.f32 %v730, %v731
        %v733 = vrot.slane %v732, 2
        %v734 = vadd.f32 %v732, %v733
        %v735 = vrot.slane %v734, 1
        %v736 = vadd.f32 %v734, %v735
        %v737 = vsel %vm394, %v736, 0.0
        %738 = vadd.xlane.f32.xlu0 %v737
        %v739 = vpop.xlane.xlu0 %738
        %v740 = vrot.slane %v739, 4
        %v741 = vadd.f32 %v739, %v740
        %v742 = vrot.slane %v741, 2
        %v743 = vadd.f32 %v741, %v742
        %v744 = vrot.slane %v743, 1
        %v745 = vadd.f32 %v743, %v744
        %s746 = vtos %v745
        %v747 = vlaneseq
        %v748 = vand.u32 %v747, 127
        %v749 = vlaneseq
        %v750 = vshrl.u32 %v749, 7
        %vm751 = vcmp.eq.s32.totalorder %v750, 0
        %vm752 = vcmp.eq.s32.totalorder %v748, 0
        %vm753 = vmand %vm751, %vm752
        %v754 = vstv %s723
        %v755 = vsel %vm753, %v754, 0.0
        %vm756 = vcmp.eq.s32.totalorder %v748, 1
        %vm757 = vmand %vm751, %vm756
        %v758 = vstv %s746
        %v759 = vsel %vm757, %v758, 0.0
        %v760 = vadd.f32 %v755, %v759
        %vm761 = vcmp.eq.s32.totalorder %v748, 2
        %vm762 = vmand %vm751, %vm761
        %v763 = vstv %s405
        %v764 = vsel %vm762, %v763, 0.0
        %v765 = vadd.f32 %v760, %v764
        %766 = vst [vmem:[%s362] sm:$0xff] %v765
        %p767 = scmp.lt.s32.totalorder %s24, 1
        %s768 = scalar_select %p767, %s24, 1
        %s769 = smul.addr %s768, 8
        %s770 = scalar_lea.vmem %s6, %s769
        // Predicated region
        $region65: #{total_loss.1} parent=43 // pred_check
          %p771 = pneg %p178
        $region66: #{total_loss.1} parent=43 // pred_check_branch
          %773 = sbr.rel (%p771) target = $region68
        $region67: #{total_loss.1} parent=43 // pred_region
          _
        $region68: #{total_loss.1} parent=43 // pred_fallthru
          _
      $region44: #{total_loss.1} parent=5 // pred_fallthru
        _
      %p774 = scmp.le.s32.totalorder 2, %s19
      // Predicated region
      $region69: #{total_loss.1} parent=5 // pred_check
        %p775 = pneg %p774
      $region70: #{total_loss.1} parent=5 // pred_check_branch
        %777 = sbr.rel (%p775) target = $region72
      $region71: #{total_loss.1} parent=5 // pred_region
        %s778 = ssub.s32 %s19, 2
        // Predicated region
        $region73: #{total_loss.1} parent=71 // pred_check
          %p779 = pneg %p184
        $region74: #{total_loss.1} parent=71 // pred_check_branch
          %781 = sbr.rel (%p779) target = $region76
        $region75: #{total_loss.1} parent=71 // pred_region
          %p782 = scmp.lt.s32.totalorder %s25, 1
          %s783 = scalar_select %p782, %s25, 1
          %s784 = smul.addr %s783, 8
          %s785 = scalar_lea.vmem %s6, %s784
        $region76: #{total_loss.1} parent=71 // pred_fallthru
          _
      $region72: #{total_loss.1} parent=5 // pred_fallthru
        _
    $region6: #{total_loss.1} parent=1 // loop_footer
      %s23 = sadd.s32 1, %s19
    $region7: #{total_loss.1} parent=1 // loop_footer_branch
      %18 = sbr.rel target = $region3
    $region8: #{total_loss.1} parent=1 // loop_exit
      _
    %786 = vsyncpa [#allocation3], 1
    %s787 = scalar_lea.sflag [#allocation3], 1
    %788 = vsyncpa %s787, 1
    %789 = vsyncpa [#allocation5], 1
    %s790 = scalar_lea.sflag [#allocation5], 1
    %791 = vsyncpa %s790, 1
    %792 = vsyncpa [#allocation8], 1

</llo_original>
